<compile_context>
chip_gen: v5e
topology: v5e:2x2
jax: 0.10.0
libtpu: 0.0.40
codegen_flags: <defaults>
</compile_context>

<pallas_src>
import math
import functools

import numpy as np
import jax
import jax.numpy as jnp
from jax.experimental import pallas as pl
from jax.experimental.pallas import tpu as pltpu


def _round_up(x, m):
    return ((x + m - 1) // m) * m


# ----------------------------- Pallas kernel --------------------------------
def _conv_ae_fused_kernel(*refs):
    """refs = [patches1, w1_aug, (sel_l, w_l, b_l) * num_hidden, out].

    Layer 1 :  h = relu(patches1 @ w1_aug)          (bias folded into w1_aug)
    Layer l :  patches_l = sel_l @ h                (im2col gather as matmul)
               h = relu(bias_l + sum_t patches_l[t] @ w_l[t])
    Everything stays VMEM-resident for the whole grid step (one image).
    """
    p1_ref, w1_ref, out_ref = refs[0], refs[1], refs[-1]
    num_hidden = (len(refs) - 3) // 3

    # Layer 1: lane-dense im2col GEMM + ReLU on the MXU/VPU.
    h = jnp.maximum(
        jnp.dot(p1_ref[...], w1_ref[...], preferred_element_type=jnp.float32),
        0.0)

    for l in range(num_hidden):
        sel_ref, w_ref, b_ref = refs[2 + 3 * l: 5 + 3 * l]
        taps = w_ref.shape[0]                 # kh * kw
        cpad = w_ref.shape[2]                 # 128-padded channel width
        m_out = sel_ref.shape[0] // taps      # padded output pixels per image

        # In-kernel im2col of the previous activation: one-hot selection
        # matmul (taps*m_out, m_in) @ (m_in, cpad) — no strided gather, no HBM.
        patches = jnp.dot(sel_ref[...], h, preferred_element_type=jnp.float32)

        # Accumulator initialised with the broadcast bias.
        acc = jnp.broadcast_to(b_ref[...], (m_out, cpad))
        for t in range(taps):                 # static unroll over taps
            acc = acc + jnp.dot(patches[t * m_out:(t + 1) * m_out, :],
                                w_ref[t],
                                preferred_element_type=jnp.float32)
        h = jnp.maximum(acc, 0.0)

    out_ref[...] = h.astype(out_ref.dtype)    # lane-dense (M_pad, 128) store


# ------------------------------ JAX glue -------------------------------------
def tf_same_pad(x_nhwc, kh, kw, sh, sw):
    """TensorFlow-style 'SAME' padding (extra pixel goes to bottom/right),
    identical to the module's Conv2dSamePad."""
    _, H, W, _ = x_nhwc.shape
    out_h = math.ceil(H / sh)
    out_w = math.ceil(W / sw)
    pad_h = max((out_h - 1) * sh + kh - H, 0)
    pad_w = max((out_w - 1) * sw + kw - W, 0)
    pt = pad_h // 2
    pb = pad_h - pt
    plft = pad_w // 2
    pr = pad_w - plft
    return jnp.pad(x_nhwc, ((0, 0), (pt, pb), (plft, pr), (0, 0)))


def im2col(x_pad, kh, kw, sh, sw, out_h, out_w):
    """(N, Hp, Wp, Cin) -> (N, out_h, out_w, kh*kw*Cin), kh-major, cin-last."""
    cols = []
    for i in range(kh):
        for j in range(kw):
            cols.append(
                x_pad[:, i:i + sh * (out_h - 1) + 1:sh,
                      j:j + sw * (out_w - 1) + 1:sw, :])
    return jnp.concatenate(cols, axis=-1)


def conv_ae_forward(x_nchw, params, kernels, stride=2):
    """ConvAE.forward: repeated [TF-'SAME' pad -> conv(stride=2) -> ReLU],
    evaluated by one fused Pallas kernel (grid = one image per step)."""
    x = jnp.transpose(x_nchw, (0, 2, 3, 1)).astype(jnp.float32)  # NCHW -> NHWC
    N, H, W, Cin = x.shape

    # Shared lane width for all in-kernel activations / weights.
    cpad = _round_up(max(w.shape[0] for w, _ in params), 128)

    # ---- layer 1: host-side im2col -> lane-dense GEMM operands -------------
    k0 = kernels[0]
    w0, b0 = params[0]
    c0 = w0.shape[0]
    oh = math.ceil(H / stride)
    ow = math.ceil(W / stride)
    xp = tf_same_pad(x, k0, k0, stride, stride)
    patches = im2col(xp, k0, k0, stride, stride, oh, ow)   # (N, oh, ow, K1)
    K1 = k0 * k0 * Cin
    M1 = oh * ow
    m1_pad = _round_up(M1, 8)
    k1_pad = _round_up(K1 + 1, 128)                        # +1: bias column
    p1 = patches.reshape(N, M1, K1)
    p1 = jnp.concatenate([p1, jnp.ones((N, M1, 1), p1.dtype)], axis=-1)
    p1 = jnp.pad(p1, ((0, 0), (0, m1_pad - M1), (0, k1_pad - (K1 + 1))))
    p1 = p1.reshape(N * m1_pad, k1_pad)

    # PyTorch (Cout, Cin, KH, KW) -> (KH*KW*Cin, Cout) matching the im2col
    # ordering (kh-major, kw, cin-last); bias appended as the ones-column row.
    w1 = jnp.transpose(w0, (2, 3, 1, 0)).reshape(K1, c0)
    w1 = jnp.concatenate([w1, b0.reshape(1, c0)], axis=0)
    w1 = jnp.pad(w1, ((0, k1_pad - (K1 + 1)), (0, cpad - c0)))

    operands = [p1, w1]
    in_specs = [
        pl.BlockSpec((m1_pad, k1_pad), lambda n: (n, 0)),   # per-image rows
        pl.BlockSpec((k1_pad, cpad), lambda n: (0, 0)),     # resident weights
    ]

    # ---- layers 2..L: in-kernel im2col via one-hot selection matmuls -------
    h_sp, w_sp = oh, ow                     # spatial dims of current activation
    m_rows, m_rows_pad = M1, m1_pad
    c_prev = c0
    for li in range(1, len(kernels)):
        k = kernels[li]
        w, b = params[li]
        c_out = w.shape[0]
        oh = math.ceil(h_sp / stride)
        ow = math.ceil(w_sp / stride)
        m_out = oh * ow
        m_out_pad = _round_up(m_out, 8)
        pad_h = max((oh - 1) * stride + k - h_sp, 0)
        pad_w = max((ow - 1) * stride + k - w_sp, 0)
        pt, plft = pad_h // 2, pad_w // 2   # TF 'SAME': extra pad bottom/right

        # One-hot gather matrix: tap t, output pixel m -> input row of h.
        sel = np.zeros((k * k, m_out_pad, m_rows_pad), np.float32)
        for p in range(oh):
            for q in range(ow):
                for i in range(k):
                    for j in range(k):
                        hh = p * stride + i - pt
                        ww = q * stride + j - plft
                        if 0 <= hh < h_sp and 0 <= ww < w_sp:
                            sel[i * k + j, p * ow + q, hh * w_sp + ww] = 1.0
        sel2d = jnp.asarray(sel.reshape(k * k * m_out_pad, m_rows_pad))

        wt = jnp.transpose(w, (2, 3, 1, 0)).reshape(k * k, c_prev, c_out)
        wt = jnp.pad(wt, ((0, 0), (0, cpad - c_prev), (0, cpad - c_out)))
        bp = jnp.pad(b.reshape(1, c_out), ((0, 0), (0, cpad - c_out)))

        operands += [sel2d, wt, bp]
        in_specs += [
            pl.BlockSpec((k * k * m_out_pad, m_rows_pad), lambda n: (0, 0)),
            pl.BlockSpec((k * k, cpad, cpad), lambda n: (0, 0, 0)),
            pl.BlockSpec((1, cpad), lambda n: (0, 0)),
        ]
        h_sp, w_sp = oh, ow
        m_rows, m_rows_pad = m_out, m_out_pad
        c_prev = c_out

    out = pl.pallas_call(
        _conv_ae_fused_kernel,
        out_shape=jax.ShapeDtypeStruct((N * m_rows_pad, cpad), jnp.float32),
        grid=(N,),
        in_specs=in_specs,
        out_specs=pl.BlockSpec((m_rows_pad, cpad), lambda n: (n, 0)),
        compiler_params=pltpu.CompilerParams(
            dimension_semantics=("parallel",)),   # one image per TC on v7x
    )(*operands)

    # Slice off row/channel padding, restore NCHW.
    out = out.reshape(N, m_rows_pad, cpad)[:, :m_rows, :c_prev]
    out = out.reshape(N, h_sp, w_sp, c_prev)
    return jnp.transpose(out, (0, 3, 1, 2))


def reference_forward(x_nchw, params, kernels, stride=2):
    """Pure-JAX reference using XLA conv with TF 'SAME' padding."""
    x = jnp.transpose(x_nchw, (0, 2, 3, 1))
    for (w, b), k in zip(params, kernels):
        w_hwio = jnp.transpose(w, (2, 3, 1, 0))
        x = jax.lax.conv_general_dilated(
            x, w_hwio, window_strides=(stride, stride), padding="SAME",
            dimension_numbers=("NHWC", "HWIO", "NHWC"))
        x = jnp.maximum(x + b, 0.0)
    return jnp.transpose(x, (0, 3, 1, 2))


# -------------------------------- main ---------------------------------------
if __name__ == "__main__":
    channels = [4, 8, 16]   # includes input channel count, as in ConvAE
    kernels = [3, 3]
    N, Hin, Win = 2, 16, 16

    key = jax.random.PRNGKey(0)
    keys = jax.random.split(key, 1 + 2 * len(kernels))
    x = jax.random.normal(keys[0], (N, channels[0], Hin, Win), dtype=jnp.float32)

    # Deterministic parameter init mimicking nn.Conv2d defaults
    # (uniform(-1/sqrt(fan_in), 1/sqrt(fan_in)) for weight and bias).
    params = []
    for i, k in enumerate(kernels):
        cin, cout = channels[i], channels[i + 1]
        fan_in = cin * k * k
        bound = 1.0 / math.sqrt(fan_in)
        w = jax.random.uniform(keys[1 + 2 * i], (cout, cin, k, k),
                               jnp.float32, -bound, bound)
        b = jax.random.uniform(keys[2 + 2 * i], (cout,),
                               jnp.float32, -bound, bound)
        params.append((w, b))

    fwd = jax.jit(functools.partial(conv_ae_forward, kernels=kernels))
    out = jax.block_until_ready(fwd(x, params))

    # Shape check: two stride-2 layers -> spatial / 4.
    assert out.shape == (N, channels[-1], Hin // 4, Win // 4), out.shape

    ref = reference_forward(x, params, kernels)
    err = float(jnp.max(jnp.abs(out - ref)))
    assert err < 1e-4, f"mismatch vs reference: {err}"

    print("KERNEL_OK")
</pallas_src>

<mosaic_0001>
module attributes {stable_mosaic.version = 11 : i64} {
  func.func @_conv_ae_fused_kernel(%arg0: i32, %arg1: memref<64x128xf32, #tpu.memory_space<vmem>>, %arg2: memref<128x128xf32, #tpu.memory_space<vmem>>, %arg3: memref<144x64xf32, #tpu.memory_space<vmem>>, %arg4: memref<9x128x128xf32, #tpu.memory_space<vmem>>, %arg5: memref<1x128xf32, #tpu.memory_space<vmem>>, %arg6: memref<16x128xf32, #tpu.memory_space<vmem>>) attributes {dimension_semantics = [#tpu.dimension_semantics<parallel>], iteration_bounds = array<i64: 2>, scalar_prefetch = 0 : i64, scratch_operands = 0 : i64, tpu.core_type = #tpu.core_type<tc>, window_params = [{transform_indices = @transform_0, window_bounds = array<i64: 64, 128>}, {pipeline_mode = #tpu.pipeline_mode<synchronous>, transform_indices = @transform_1, window_bounds = array<i64: 128, 128>}, {pipeline_mode = #tpu.pipeline_mode<synchronous>, transform_indices = @transform_2, window_bounds = array<i64: 144, 64>}, {pipeline_mode = #tpu.pipeline_mode<synchronous>, transform_indices = @transform_3, window_bounds = array<i64: 9, 128, 128>}, {pipeline_mode = #tpu.pipeline_mode<synchronous>, transform_indices = @transform_4, window_bounds = array<i64: 1, 128>}, {transform_indices = @transform_5, window_bounds = array<i64: 16, 128>}]} {
    %c0 = arith.constant 0 : index
    %c0_0 = arith.constant 0 : index
    %0 = vector.load %arg1[%c0, %c0_0] : memref<64x128xf32, #tpu.memory_space<vmem>>, vector<64x128xf32>
    %c0_1 = arith.constant 0 : index
    %c0_2 = arith.constant 0 : index
    %1 = vector.load %arg2[%c0_1, %c0_2] : memref<128x128xf32, #tpu.memory_space<vmem>>, vector<128x128xf32>
    %cst = arith.constant dense<0.000000e+00> : vector<64x128xf32>
    %2 = tpu.matmul %0, %1, %cst {dimension_numbers = #tpu.dot_dimension_numbers<[1], [0], [0], [1], [0, 0, 1, 1], [], []>} : vector<64x128xf32>, vector<128x128xf32>, vector<64x128xf32> -> vector<64x128xf32>
    %cst_3 = arith.constant 0.000000e+00 : f32
    %3 = vector.broadcast %cst_3 : f32 to vector<64x128xf32>
    %4 = arith.maximumf %2, %3 : vector<64x128xf32>
    %c0_4 = arith.constant 0 : index
    %c0_5 = arith.constant 0 : index
    %5 = vector.load %arg3[%c0_4, %c0_5] : memref<144x64xf32, #tpu.memory_space<vmem>>, vector<144x64xf32>
    %cst_6 = arith.constant dense<0.000000e+00> : vector<144x128xf32>
    %6 = tpu.matmul %5, %4, %cst_6 {dimension_numbers = #tpu.dot_dimension_numbers<[1], [0], [0], [1], [0, 0, 1, 1], [], []>} : vector<144x64xf32>, vector<64x128xf32>, vector<144x128xf32> -> vector<144x128xf32>
    %c0_7 = arith.constant 0 : index
    %c0_8 = arith.constant 0 : index
    %7 = vector.load %arg5[%c0_7, %c0_8] : memref<1x128xf32, #tpu.memory_space<vmem>>, vector<1x128xf32>
    %8 = vector.shape_cast %7 : vector<1x128xf32> to vector<1x128xf32>
    %9 = vector.broadcast %8 : vector<1x128xf32> to vector<16x128xf32>
    %10 = vector.extract_strided_slice %6 {offsets = [0, 0], sizes = [16, 128], strides = [1, 1]} : vector<144x128xf32> to vector<16x128xf32>
    %c0_9 = arith.constant 0 : index
    %c0_10 = arith.constant 0 : index
    %c0_11 = arith.constant 0 : index
    %11 = vector.load %arg4[%c0_9, %c0_10, %c0_11] : memref<9x128x128xf32, #tpu.memory_space<vmem>>, vector<1x128x128xf32>
    %12 = vector.shape_cast %11 : vector<1x128x128xf32> to vector<128x128xf32>
    %cst_12 = arith.constant dense<0.000000e+00> : vector<16x128xf32>
    %13 = tpu.matmul %10, %12, %cst_12 {dimension_numbers = #tpu.dot_dimension_numbers<[1], [0], [0], [1], [0, 0, 1, 1], [], []>} : vector<16x128xf32>, vector<128x128xf32>, vector<16x128xf32> -> vector<16x128xf32>
    %14 = arith.addf %9, %13 : vector<16x128xf32>
    %15 = vector.extract_strided_slice %6 {offsets = [16, 0], sizes = [16, 128], strides = [1, 1]} : vector<144x128xf32> to vector<16x128xf32>
    %c1 = arith.constant 1 : index
    %c0_13 = arith.constant 0 : index
    %c0_14 = arith.constant 0 : index
    %16 = vector.load %arg4[%c1, %c0_13, %c0_14] : memref<9x128x128xf32, #tpu.memory_space<vmem>>, vector<1x128x128xf32>
    %17 = vector.shape_cast %16 : vector<1x128x128xf32> to vector<128x128xf32>
    %cst_15 = arith.constant dense<0.000000e+00> : vector<16x128xf32>
    %18 = tpu.matmul %15, %17, %cst_15 {dimension_numbers = #tpu.dot_dimension_numbers<[1], [0], [0], [1], [0, 0, 1, 1], [], []>} : vector<16x128xf32>, vector<128x128xf32>, vector<16x128xf32> -> vector<16x128xf32>
    %19 = arith.addf %14, %18 : vector<16x128xf32>
    %20 = vector.extract_strided_slice %6 {offsets = [32, 0], sizes = [16, 128], strides = [1, 1]} : vector<144x128xf32> to vector<16x128xf32>
    %c2 = arith.constant 2 : index
    %c0_16 = arith.constant 0 : index
    %c0_17 = arith.constant 0 : index
    %21 = vector.load %arg4[%c2, %c0_16, %c0_17] : memref<9x128x128xf32, #tpu.memory_space<vmem>>, vector<1x128x128xf32>
    %22 = vector.shape_cast %21 : vector<1x128x128xf32> to vector<128x128xf32>
    %cst_18 = arith.constant dense<0.000000e+00> : vector<16x128xf32>
    %23 = tpu.matmul %20, %22, %cst_18 {dimension_numbers = #tpu.dot_dimension_numbers<[1], [0], [0], [1], [0, 0, 1, 1], [], []>} : vector<16x128xf32>, vector<128x128xf32>, vector<16x128xf32> -> vector<16x128xf32>
    %24 = arith.addf %19, %23 : vector<16x128xf32>
    %25 = vector.extract_strided_slice %6 {offsets = [48, 0], sizes = [16, 128], strides = [1, 1]} : vector<144x128xf32> to vector<16x128xf32>
    %c3 = arith.constant 3 : index
    %c0_19 = arith.constant 0 : index
    %c0_20 = arith.constant 0 : index
    %26 = vector.load %arg4[%c3, %c0_19, %c0_20] : memref<9x128x128xf32, #tpu.memory_space<vmem>>, vector<1x128x128xf32>
    %27 = vector.shape_cast %26 : vector<1x128x128xf32> to vector<128x128xf32>
    %cst_21 = arith.constant dense<0.000000e+00> : vector<16x128xf32>
    %28 = tpu.matmul %25, %27, %cst_21 {dimension_numbers = #tpu.dot_dimension_numbers<[1], [0], [0], [1], [0, 0, 1, 1], [], []>} : vector<16x128xf32>, vector<128x128xf32>, vector<16x128xf32> -> vector<16x128xf32>
    %29 = arith.addf %24, %28 : vector<16x128xf32>
    %30 = vector.extract_strided_slice %6 {offsets = [64, 0], sizes = [16, 128], strides = [1, 1]} : vector<144x128xf32> to vector<16x128xf32>
    %c4 = arith.constant 4 : index
    %c0_22 = arith.constant 0 : index
    %c0_23 = arith.constant 0 : index
    %31 = vector.load %arg4[%c4, %c0_22, %c0_23] : memref<9x128x128xf32, #tpu.memory_space<vmem>>, vector<1x128x128xf32>
    %32 = vector.shape_cast %31 : vector<1x128x128xf32> to vector<128x128xf32>
    %cst_24 = arith.constant dense<0.000000e+00> : vector<16x128xf32>
    %33 = tpu.matmul %30, %32, %cst_24 {dimension_numbers = #tpu.dot_dimension_numbers<[1], [0], [0], [1], [0, 0, 1, 1], [], []>} : vector<16x128xf32>, vector<128x128xf32>, vector<16x128xf32> -> vector<16x128xf32>
    %34 = arith.addf %29, %33 : vector<16x128xf32>
    %35 = vector.extract_strided_slice %6 {offsets = [80, 0], sizes = [16, 128], strides = [1, 1]} : vector<144x128xf32> to vector<16x128xf32>
    %c5 = arith.constant 5 : index
    %c0_25 = arith.constant 0 : index
    %c0_26 = arith.constant 0 : index
    %36 = vector.load %arg4[%c5, %c0_25, %c0_26] : memref<9x128x128xf32, #tpu.memory_space<vmem>>, vector<1x128x128xf32>
    %37 = vector.shape_cast %36 : vector<1x128x128xf32> to vector<128x128xf32>
    %cst_27 = arith.constant dense<0.000000e+00> : vector<16x128xf32>
    %38 = tpu.matmul %35, %37, %cst_27 {dimension_numbers = #tpu.dot_dimension_numbers<[1], [0], [0], [1], [0, 0, 1, 1], [], []>} : vector<16x128xf32>, vector<128x128xf32>, vector<16x128xf32> -> vector<16x128xf32>
    %39 = arith.addf %34, %38 : vector<16x128xf32>
    %40 = vector.extract_strided_slice %6 {offsets = [96, 0], sizes = [16, 128], strides = [1, 1]} : vector<144x128xf32> to vector<16x128xf32>
    %c6 = arith.constant 6 : index
    %c0_28 = arith.constant 0 : index
    %c0_29 = arith.constant 0 : index
    %41 = vector.load %arg4[%c6, %c0_28, %c0_29] : memref<9x128x128xf32, #tpu.memory_space<vmem>>, vector<1x128x128xf32>
    %42 = vector.shape_cast %41 : vector<1x128x128xf32> to vector<128x128xf32>
    %cst_30 = arith.constant dense<0.000000e+00> : vector<16x128xf32>
    %43 = tpu.matmul %40, %42, %cst_30 {dimension_numbers = #tpu.dot_dimension_numbers<[1], [0], [0], [1], [0, 0, 1, 1], [], []>} : vector<16x128xf32>, vector<128x128xf32>, vector<16x128xf32> -> vector<16x128xf32>
    %44 = arith.addf %39, %43 : vector<16x128xf32>
    %45 = vector.extract_strided_slice %6 {offsets = [112, 0], sizes = [16, 128], strides = [1, 1]} : vector<144x128xf32> to vector<16x128xf32>
    %c7 = arith.constant 7 : index
    %c0_31 = arith.constant 0 : index
    %c0_32 = arith.constant 0 : index
    %46 = vector.load %arg4[%c7, %c0_31, %c0_32] : memref<9x128x128xf32, #tpu.memory_space<vmem>>, vector<1x128x128xf32>
    %47 = vector.shape_cast %46 : vector<1x128x128xf32> to vector<128x128xf32>
    %cst_33 = arith.constant dense<0.000000e+00> : vector<16x128xf32>
    %48 = tpu.matmul %45, %47, %cst_33 {dimension_numbers = #tpu.dot_dimension_numbers<[1], [0], [0], [1], [0, 0, 1, 1], [], []>} : vector<16x128xf32>, vector<128x128xf32>, vector<16x128xf32> -> vector<16x128xf32>
    %49 = arith.addf %44, %48 : vector<16x128xf32>
    %50 = vector.extract_strided_slice %6 {offsets = [128, 0], sizes = [16, 128], strides = [1, 1]} : vector<144x128xf32> to vector<16x128xf32>
    %c8 = arith.constant 8 : index
    %c0_34 = arith.constant 0 : index
    %c0_35 = arith.constant 0 : index
    %51 = vector.load %arg4[%c8, %c0_34, %c0_35] : memref<9x128x128xf32, #tpu.memory_space<vmem>>, vector<1x128x128xf32>
    %52 = vector.shape_cast %51 : vector<1x128x128xf32> to vector<128x128xf32>
    %cst_36 = arith.constant dense<0.000000e+00> : vector<16x128xf32>
    %53 = tpu.matmul %50, %52, %cst_36 {dimension_numbers = #tpu.dot_dimension_numbers<[1], [0], [0], [1], [0, 0, 1, 1], [], []>} : vector<16x128xf32>, vector<128x128xf32>, vector<16x128xf32> -> vector<16x128xf32>
    %54 = arith.addf %49, %53 : vector<16x128xf32>
    %cst_37 = arith.constant 0.000000e+00 : f32
    %55 = vector.broadcast %cst_37 : f32 to vector<16x128xf32>
    %56 = arith.maximumf %54, %55 : vector<16x128xf32>
    %c0_38 = arith.constant 0 : index
    %c0_39 = arith.constant 0 : index
    %57 = vector.load %arg6[%c0_38, %c0_39] : memref<16x128xf32, #tpu.memory_space<vmem>>, vector<16x128xf32>
    tpu.vector_store %arg6[%c0_38, %c0_39], %56 {strides = array<i32>} : memref<16x128xf32, #tpu.memory_space<vmem>>, vector<16x128xf32>,
    return
  }
  func.func @transform_0(%arg0: i32) -> (i32, i32) {
    %c0_i32 = arith.constant 0 : i32
    %c0_i32_0 = arith.constant 0 : i32
    return %arg0, %c0_i32 : i32, i32
  }
  func.func @transform_1(%arg0: i32) -> (i32, i32) {
    %c0_i32 = arith.constant 0 : i32
    %c0_i32_0 = arith.constant 0 : i32
    %c0_i32_1 = arith.constant 0 : i32
    return %c0_i32, %c0_i32_0 : i32, i32
  }
  func.func @transform_2(%arg0: i32) -> (i32, i32) {
    %c0_i32 = arith.constant 0 : i32
    %c0_i32_0 = arith.constant 0 : i32
    %c0_i32_1 = arith.constant 0 : i32
    return %c0_i32, %c0_i32_0 : i32, i32
  }
  func.func @transform_3(%arg0: i32) -> (i32, i32, i32) {
    %c0_i32 = arith.constant 0 : i32
    %c0_i32_0 = arith.constant 0 : i32
    %c0_i32_1 = arith.constant 0 : i32
    %c0_i32_2 = arith.constant 0 : i32
    return %c0_i32, %c0_i32_0, %c0_i32_1 : i32, i32, i32
  }
  func.func @transform_4(%arg0: i32) -> (i32, i32) {
    %c0_i32 = arith.constant 0 : i32
    %c0_i32_0 = arith.constant 0 : i32
    %c0_i32_1 = arith.constant 0 : i32
    return %c0_i32, %c0_i32_0 : i32, i32
  }
  func.func @transform_5(%arg0: i32) -> (i32, i32) {
    %c0_i32 = arith.constant 0 : i32
    %c0_i32_0 = arith.constant 0 : i32
    return %arg0, %c0_i32 : i32, i32
  }
}

</mosaic_0001>

<llo_original>
// kernel: conv_ae_forward.1
$region0: #{conv_ae_forward.1}
  #allocation0 [shape = 'u32[]', space=smem, size = 0x4, offset = 0x4, fixed_abs, tag = 'smem constant byte address 0x4 - core index']
  #allocation1 [shape = 'u32[72,128]{1,0:T(1,128)}', space=vmem, size = 0x9000, scoped, tag = 'internal scratch']
  %s0 = inlined_call_operand.vmem [shape: f32[128,128], index: 0, kind: input, shape index: {}]
  %s1 = inlined_call_operand.vmem [shape: f32[128,128], index: 1, kind: input, shape index: {}]
  %s2 = inlined_call_operand.vmem [shape: f32[144,64], index: 2, kind: input, shape index: {}]
  %s3 = inlined_call_operand.vmem [shape: f32[9,128,128], index: 3, kind: input, shape index: {}]
  %s4 = inlined_call_operand.vmem [shape: f32[1,128], index: 4, kind: input, shape index: {}]
  %s5 = inlined_call_operand.hbm [shape: f32[32,128], index: 5, kind: output, shape index: {}]
  %s6 = sld [smem:[#allocation0]]
  $region53: #{conv_ae_forward.1} parent=0
    _
  %s8 = ssub.s32 1, %s6
  %s9 = scalar_select 0, %s8, %s6
  $region1: #{conv_ae_forward.1} parent=0
    #allocation2 [shape = 'u8[16384]{0}', space=vmem, size = 0x4000, scoped, tag = 'output window, operand 0']
    #allocation3 [shape = 's32[2]{0}', space=sflag, size = 0x8, scoped, tag = 'scoped memory for conv_ae_forward.1']
    %10 = vsyncpa [#allocation3], 0
    %s11 = scalar_lea.sflag [#allocation3], 1
    %12 = vsyncpa %s11, 0
    loop: start=0, step=1, limit=4
    $region2: #{conv_ae_forward.1} parent=1 // loop_pre_header
      _
    $region3: #{conv_ae_forward.1} parent=1 // loop_header
      %s14 = sphi 0, %s18
      %p15 = scmp.ge.s32.totalorder %s14, 4
      %s24 = sphi 0, %s26
      %s27 = sphi 0, %s24
      %s28 = sphi 0, %s27
      %s44 = sphi 0, %s28
      %s48 = sphi 0, %s48
      %s50 = sphi 0, %s48
      %s51 = sphi 0, %s50
      %s65 = sphi 0, %s51
      %s69 = sphi 0, %s69
      %s71 = sphi 0, %s69
      %s72 = sphi 0, %s71
      %s86 = sphi 0, %s72
      %s90 = sphi 0, %s90
      %s92 = sphi 0, %s90
      %s93 = sphi 0, %s92
      %s107 = sphi 0, %s93
      %s111 = sphi 0, %s111
      %s113 = sphi 0, %s111
      %s114 = sphi 0, %s113
      %s128 = sphi 0, %s114
      %s134 = sphi 0, %s136
      %s137 = sphi 0, %s134
      %s138 = sphi 0, %s137
      %s154 = sphi 0, %s138
    $region4: #{conv_ae_forward.1} parent=1 // loop_header_branch
      %17 = sbr.rel (%p15) target = $region8
    $region5: #{conv_ae_forward.1} parent=1 // loop_body
      %s19 = ssub.s32 %s14, 1
      %s20 = ssub.s32 %s14, 2
      %s21 = sadd.s32 %s14, 1
      %s22 = ssub.s32 %s14, %s21
      %p23 = scmp.eq.s32.totalorder %s22, 0
      %s25 = sadd.s32 %s24, 1
      %s26 = scalar_select %p23, %s24, %s25
      %p29 = pneg %p23
      %p30 = scmp.eq.s32.totalorder %s14, 1
      %p31 = por %p29, %p30
      %p32 = scmp.ne.s32.totalorder %s24, %s27
      %p33 = scmp.eq.s32.totalorder %s14, 0
      %p34 = por %p32, %p33
      %p35 = scmp.ne.s32.totalorder %s24, %s27
      %p36 = scmp.eq.s32.totalorder %s19, 1
      %p37 = por %p35, %p36
      %p38 = scmp.ne.s32.totalorder %s27, %s28
      %p39 = scmp.eq.s32.totalorder %s19, 0
      %p40 = por %p38, %p39
      %p41 = scmp.ne.s32.totalorder %s27, %s28
      %p42 = scmp.eq.s32.totalorder %s20, 1
      %p43 = por %p41, %p42
      %p45 = scmp.ne.s32.totalorder %s28, %s44
      %p46 = scmp.eq.s32.totalorder %s20, 0
      %p47 = por %p45, %p46
      %s49 = sadd.s32 %s48, 1
      %p52 = scmp.eq.s32.totalorder %s14, 1
      %p53 = scmp.ne.s32.totalorder %s48, %s50
      %p54 = scmp.eq.s32.totalorder %s14, 0
      %p55 = por %p53, %p54
      %p56 = scmp.ne.s32.totalorder %s48, %s50
      %p57 = scmp.eq.s32.totalorder %s19, 1
      %p58 = por %p56, %p57
      %p59 = scmp.ne.s32.totalorder %s50, %s51
      %p60 = scmp.eq.s32.totalorder %s19, 0
      %p61 = por %p59, %p60
      %p62 = scmp.ne.s32.totalorder %s50, %s51
      %p63 = scmp.eq.s32.totalorder %s20, 1
      %p64 = por %p62, %p63
      %p66 = scmp.ne.s32.totalorder %s51, %s65
      %p67 = scmp.eq.s32.totalorder %s20, 0
      %p68 = por %p66, %p67
      %s70 = sadd.s32 %s69, 1
      %p73 = scmp.eq.s32.totalorder %s14, 1
      %p74 = scmp.ne.s32.totalorder %s69, %s71
      %p75 = scmp.eq.s32.totalorder %s14, 0
      %p76 = por %p74, %p75
      %p77 = scmp.ne.s32.totalorder %s69, %s71
      %p78 = scmp.eq.s32.totalorder %s19, 1
      %p79 = por %p77, %p78
      %p80 = scmp.ne.s32.totalorder %s71, %s72
      %p81 = scmp.eq.s32.totalorder %s19, 0
      %p82 = por %p80, %p81
      %p83 = scmp.ne.s32.totalorder %s71, %s72
      %p84 = scmp.eq.s32.totalorder %s20, 1
      %p85 = por %p83, %p84
      %p87 = scmp.ne.s32.totalorder %s72, %s86
      %p88 = scmp.eq.s32.totalorder %s20, 0
      %p89 = por %p87, %p88
      %s91 = sadd.s32 %s90, 1
      %p94 = scmp.eq.s32.totalorder %s14, 1
      %p95 = scmp.ne.s32.totalorder %s90, %s92
      %p96 = scmp.eq.s32.totalorder %s14, 0
      %p97 = por %p95, %p96
      %p98 = scmp.ne.s32.totalorder %s90, %s92
      %p99 = scmp.eq.s32.totalorder %s19, 1
      %p100 = por %p98, %p99
      %p101 = scmp.ne.s32.totalorder %s92, %s93
      %p102 = scmp.eq.s32.totalorder %s19, 0
      %p103 = por %p101, %p102
      %p104 = scmp.ne.s32.totalorder %s92, %s93
      %p105 = scmp.eq.s32.totalorder %s20, 1
      %p106 = por %p104, %p105
      %p108 = scmp.ne.s32.totalorder %s93, %s107
      %p109 = scmp.eq.s32.totalorder %s20, 0
      %p110 = por %p108, %p109
      %s112 = sadd.s32 %s111, 1
      %p115 = scmp.eq.s32.totalorder %s14, 1
      %p116 = scmp.ne.s32.totalorder %s111, %s113
      %p117 = scmp.eq.s32.totalorder %s14, 0
      %p118 = por %p116, %p117
      %p119 = scmp.ne.s32.totalorder %s111, %s113
      %p120 = scmp.eq.s32.totalorder %s19, 1
      %p121 = por %p119, %p120
      %p122 = scmp.ne.s32.totalorder %s113, %s114
      %p123 = scmp.eq.s32.totalorder %s19, 0
      %p124 = por %p122, %p123
      %p125 = scmp.ne.s32.totalorder %s113, %s114
      %p126 = scmp.eq.s32.totalorder %s20, 1
      %p127 = por %p125, %p126
      %p129 = scmp.ne.s32.totalorder %s114, %s128
      %p130 = scmp.eq.s32.totalorder %s20, 0
      %p131 = por %p129, %p130
      %s132 = ssub.s32 %s14, %s21
      %p133 = scmp.eq.s32.totalorder %s132, 0
      %s135 = sadd.s32 %s134, 1
      %s136 = scalar_select %p133, %s134, %s135
      %p139 = pneg %p133
      %p140 = scmp.eq.s32.totalorder %s14, 1
      %p141 = por %p139, %p140
      %p142 = scmp.ne.s32.totalorder %s134, %s137
      %p143 = scmp.eq.s32.totalorder %s14, 0
      %p144 = por %p142, %p143
      %p145 = scmp.ne.s32.totalorder %s134, %s137
      %p146 = scmp.eq.s32.totalorder %s19, 1
      %p147 = por %p145, %p146
      %p148 = scmp.ne.s32.totalorder %s137, %s138
      %p149 = scmp.eq.s32.totalorder %s19, 0
      %p150 = por %p148, %p149
      %p151 = scmp.ne.s32.totalorder %s137, %s138
      %p152 = scmp.eq.s32.totalorder %s20, 1
      %p153 = por %p151, %p152
      %p155 = scmp.ne.s32.totalorder %s138, %s154
      %p156 = scmp.eq.s32.totalorder %s20, 0
      %p157 = por %p155, %p156
      %p158 = scmp.le.s32.totalorder 1, %s14
      %p159 = scmp.lt.s32.totalorder %s14, 3
      %p160 = pnand %p158, %p159
      %p161 = pneg %p160
      // Predicated region
      $region9: #{conv_ae_forward.1} parent=5 // pred_check
        _
      $region10: #{conv_ae_forward.1} parent=5 // pred_check_branch
        %163 = sbr.rel (%p160) target = $region12
      $region11: #{conv_ae_forward.1} parent=5 // pred_region
        %s164 = ssub.s32 %s14, 1
        // Predicated region
        $region13: #{conv_ae_forward.1} parent=11 // pred_check
          %p165 = pneg %p61
        $region14: #{conv_ae_forward.1} parent=11 // pred_check_branch
          %167 = sbr.rel (%p165) target = $region16
        $region15: #{conv_ae_forward.1} parent=11 // pred_region
          _
        $region16: #{conv_ae_forward.1} parent=11 // pred_fallthru
          _
        // Predicated region
        $region17: #{conv_ae_forward.1} parent=11 // pred_check
          %p168 = pneg %p82
        $region18: #{conv_ae_forward.1} parent=11 // pred_check_branch
          %170 = sbr.rel (%p168) target = $region20
        $region19: #{conv_ae_forward.1} parent=11 // pred_region
          _
        $region20: #{conv_ae_forward.1} parent=11 // pred_fallthru
          _
        // Predicated region
        $region21: #{conv_ae_forward.1} parent=11 // pred_check
          %p171 = pneg %p103
        $region22: #{conv_ae_forward.1} parent=11 // pred_check_branch
          %173 = sbr.rel (%p171) target = $region24
        $region23: #{conv_ae_forward.1} parent=11 // pred_region
          _
        $region24: #{conv_ae_forward.1} parent=11 // pred_fallthru
          _
        // Predicated region
        $region25: #{conv_ae_forward.1} parent=11 // pred_check
          %p174 = pneg %p124
        $region26: #{conv_ae_forward.1} parent=11 // pred_check_branch
          %176 = sbr.rel (%p174) target = $region28
        $region27: #{conv_ae_forward.1} parent=11 // pred_region
          _
        $region28: #{conv_ae_forward.1} parent=11 // pred_fallthru
          _
      $region12: #{conv_ae_forward.1} parent=5 // pred_fallthru
        _
      %p177 = scmp.lt.s32.totalorder %s14, 2
      // Predicated region
      $region29: #{conv_ae_forward.1} parent=5 // pred_check
        %p178 = pneg %p177
      $region30: #{conv_ae_forward.1} parent=5 // pred_check_branch
        %180 = sbr.rel (%p178) target = $region32
      $region31: #{conv_ae_forward.1} parent=5 // pred_region
        // Predicated region
        $region33: #{conv_ae_forward.1} parent=31 // pred_check
          %p181 = pneg %p34
        $region34: #{conv_ae_forward.1} parent=31 // pred_check_branch
          %183 = sbr.rel (%p181) target = $region36
        $region35: #{conv_ae_forward.1} parent=31 // pred_region
          %s184 = smul.u32 8, %s14
          %p185 = scmp.lt.s32.totalorder %s184, 15
          %s186 = scalar_select %p185, %s184, 15
          %s187 = smul.addr %s186, 8
          %s188 = scalar_lea.vmem %s0, %s187
          %s189 = smul.u32 8, %s14
        $region36: #{conv_ae_forward.1} parent=31 // pred_fallthru
          _
      $region32: #{conv_ae_forward.1} parent=5 // pred_fallthru
        _
      %p190 = scmp.le.s32.totalorder 1, %s14
      %p191 = scmp.lt.s32.totalorder %s14, 3
      %p192 = pnand %p190, %p191
      %p193 = pneg %p192
      // Predicated region
      $region37: #{conv_ae_forward.1} parent=5 // pred_check
        _
      $region38: #{conv_ae_forward.1} parent=5 // pred_check_branch
        %195 = sbr.rel (%p192) target = $region40
      $region39: #{conv_ae_forward.1} parent=5 // pred_region
        %s196 = ssub.s32 %s14, 1
        %s197 = smul.u32 8, %s19
        %p198 = scmp.lt.s32.totalorder %s197, 15
        %s199 = scalar_select %p198, %s197, 15
        %s200 = smul.addr %s199, 8
        %s201 = scalar_lea.vmem %s0, %s200
        %p202 = pneg %p40
        %p203 = pneg %p37
        %p204 = pneg %p61
        %p205 = pneg %p58
        %p206 = pneg %p82
        %p207 = pneg %p79
        %p208 = pneg %p103
        %p209 = pneg %p100
        %p210 = pneg %p124
        %p211 = pneg %p121
        %p212 = pneg %p150
        %p213 = pneg %p147
        %s214 = sand.u32 %s137, 1
        %s215 = scalar_lea.sflag [#allocation3], %s214
        %s216 = sand.u32 %s137, 1
        %s217 = smul.addr %s216, 16
        %s218 = scalar_lea.vmem [#allocation2], %s217
        %s219 = smul.u32 8, %s19
        %p220 = scmp.lt.s32.totalorder %s219, 15
        %s221 = scalar_select %p220, %s219, 15
        %s222 = smul.addr %s221, 8
        %s223 = scalar_lea.vmem %s0, %s222
        %s224 = smul.u32 8, %s19
        %s225 = smul.u32 2, %s19
        %v226 = vld [vmem:[%s223] sm:$0xff]
        %v227 = vld [vmem:[%s223 + $0x8] sm:$0xff]
        %v228 = vld [vmem:[%s223 + $0x10] sm:$0xff]
        %v229 = vld [vmem:[%s223 + $0x18] sm:$0xff]
        %v230 = vld [vmem:[%s223 + $0x20] sm:$0xff]
        %v231 = vld [vmem:[%s223 + $0x28] sm:$0xff]
        %v232 = vld [vmem:[%s223 + $0x30] sm:$0xff]
        %v233 = vld [vmem:[%s223 + $0x38] sm:$0xff]
        %v234 = vld [vmem:[%s1] sm:$0xff]
        %v235 = vld [vmem:[%s1 + $0x8] sm:$0xff]
        %v236 = vld [vmem:[%s1 + $0x10] sm:$0xff]
        %v237 = vld [vmem:[%s1 + $0x18] sm:$0xff]
        %v238 = vld [vmem:[%s1 + $0x20] sm:$0xff]
        %v239 = vld [vmem:[%s1 + $0x28] sm:$0xff]
        %v240 = vld [vmem:[%s1 + $0x30] sm:$0xff]
        %v241 = vld [vmem:[%s1 + $0x38] sm:$0xff]
        %v242 = vld [vmem:[%s1 + $0x40] sm:$0xff]
        %v243 = vld [vmem:[%s1 + $0x48] sm:$0xff]
        %v244 = vld [vmem:[%s1 + $0x50] sm:$0xff]
        %v245 = vld [vmem:[%s1 + $0x58] sm:$0xff]
        %v246 = vld [vmem:[%s1 + $0x60] sm:$0xff]
        %v247 = vld [vmem:[%s1 + $0x68] sm:$0xff]
        %v248 = vld [vmem:[%s1 + $0x70] sm:$0xff]
        %v249 = vld [vmem:[%s1 + $0x78] sm:$0xff]
        %250 = vmatpush.msra.mxu0 %v249
        %251 = vmatpush.msra.mxu0 %v248
        %252 = vmatpush.msra.mxu0 %v247
        %253 = vmatpush.msra.mxu0 %v246
        %254 = vmatpush.msra.mxu0 %v245
        %255 = vmatpush.msra.mxu0 %v244
        %256 = vmatpush.msra.mxu0 %v243
        %257 = vmatpush.msra.mxu0 %v242
        %258 = vmatpush.msra.mxu0 %v241
        %259 = vmatpush.msra.mxu0 %v240
        %260 = vmatpush.msra.mxu0 %v239
        %261 = vmatpush.msra.mxu0 %v238
        %262 = vmatpush.msra.mxu0 %v237
        %263 = vmatpush.msra.mxu0 %v236
        %264 = vmatpush.msra.mxu0 %v235
        %265 = vmatpush.msra.mxu0 %v234
        %266 = vmatmul.f32.gmra.mxu0 %v226
        %v267 = vpop.f32.mrf.mxu0
        %v268 = vadd.f32 0.0, %v267
        %269 = vmatmul.f32.gmra.mxu0 %v227
        %v270 = vpop.f32.mrf.mxu0
        %v271 = vadd.f32 0.0, %v270
        %272 = vmatmul.f32.gmra.mxu0 %v228
        %v273 = vpop.f32.mrf.mxu0
        %v274 = vadd.f32 0.0, %v273
        %275 = vmatmul.f32.gmra.mxu0 %v229
        %v276 = vpop.f32.mrf.mxu0
        %v277 = vadd.f32 0.0, %v276
        %278 = vmatmul.f32.gmra.mxu0 %v230
        %v279 = vpop.f32.mrf.mxu0
        %v280 = vadd.f32 0.0, %v279
        %281 = vmatmul.f32.gmra.mxu0 %v231
        %v282 = vpop.f32.mrf.mxu0
        %v283 = vadd.f32 0.0, %v282
        %284 = vmatmul.f32.gmra.mxu0 %v232
        %v285 = vpop.f32.mrf.mxu0
        %v286 = vadd.f32 0.0, %v285
        %287 = vmatmul.f32.gmra.mxu0 %v233
        %v288 = vpop.f32.mrf.mxu0
        %v289 = vadd.f32 0.0, %v288
        %290 = vdwg.mxu0
        %v291 = vmax.f32 %v268, 0.0
        %v292 = vmax.f32 %v271, 0.0
        %v293 = vmax.f32 %v274, 0.0
        %v294 = vmax.f32 %v277, 0.0
        %v295 = vmax.f32 %v280, 0.0
        %v296 = vmax.f32 %v283, 0.0
        %v297 = vmax.f32 %v286, 0.0
        %v298 = vmax.f32 %v289, 0.0
        %v299 = vld [vmem:[%s2] sm:$0xff]
        %v300 = vld [vmem:[%s2 + $0x8] sm:$0xff]
        %v301 = vld [vmem:[%s2 + $0x10] sm:$0xff]
        %v302 = vld [vmem:[%s2 + $0x18] sm:$0xff]
        %v303 = vld [vmem:[%s2 + $0x20] sm:$0xff]
        %v304 = vld [vmem:[%s2 + $0x28] sm:$0xff]
        %v305 = vld [vmem:[%s2 + $0x30] sm:$0xff]
        %v306 = vld [vmem:[%s2 + $0x38] sm:$0xff]
        %v307 = vld [vmem:[%s2 + $0x40] sm:$0xff]
        %v308 = vld [vmem:[%s2 + $0x48] sm:$0xff]
        %v309 = vld [vmem:[%s2 + $0x50] sm:$0xff]
        %v310 = vld [vmem:[%s2 + $0x58] sm:$0xff]
        %v311 = vld [vmem:[%s2 + $0x60] sm:$0xff]
        %v312 = vld [vmem:[%s2 + $0x68] sm:$0xff]
        %v313 = vld [vmem:[%s2 + $0x70] sm:$0xff]
        %v314 = vld [vmem:[%s2 + $0x78] sm:$0xff]
        %v315 = vld [vmem:[%s2 + $0x80] sm:$0xff]
        %v316 = vld [vmem:[%s2 + $0x88] sm:$0xff]
        %vm317 = vcmask 523264
        %v319 = vsel %vm317, %v299, 0
        %v322 = vsel %vm317, %v300, 0
        %v325 = vsel %vm317, %v301, 0
        %v328 = vsel %vm317, %v302, 0
        %v331 = vsel %vm317, %v303, 0
        %v334 = vsel %vm317, %v304, 0
        %v337 = vsel %vm317, %v305, 0
        %v340 = vsel %vm317, %v306, 0
        %v343 = vsel %vm317, %v307, 0
        %v346 = vsel %vm317, %v308, 0
        %v349 = vsel %vm317, %v309, 0
        %v352 = vsel %vm317, %v310, 0
        %v355 = vsel %vm317, %v311, 0
        %v358 = vsel %vm317, %v312, 0
        %v361 = vsel %vm317, %v313, 0
        %v364 = vsel %vm317, %v314, 0
        %v367 = vsel %vm317, %v315, 0
        %v370 = vsel %vm317, %v316, 0
        %372 = vmatpush.msra.mxu0 0.0
        %373 = vmatpush.msra.mxu0 0.0
        %374 = vmatpush.msra.mxu0 0.0
        %375 = vmatpush.msra.mxu0 0.0
        %376 = vmatpush.msra.mxu0 0.0
        %377 = vmatpush.msra.mxu0 0.0
        %378 = vmatpush.msra.mxu0 0.0
        %379 = vmatpush.msra.mxu0 0.0
        %380 = vmatpush.msra.mxu0 %v298
        %381 = vmatpush.msra.mxu0 %v297
        %382 = vmatpush.msra.mxu0 %v296
        %383 = vmatpush.msra.mxu0 %v295
        %384 = vmatpush.msra.mxu0 %v294
        %385 = vmatpush.msra.mxu0 %v293
        %386 = vmatpush.msra.mxu0 %v292
        %387 = vmatpush.msra.mxu0 %v291
        %388 = vmatmul.f32.gmra.mxu0 %v319
        %v389 = vpop.f32.mrf.mxu0
        %v390 = vadd.f32 0.0, %v389
        %391 = vmatmul.f32.gmra.mxu0 %v322
        %v392 = vpop.f32.mrf.mxu0
        %v393 = vadd.f32 0.0, %v392
        %394 = vmatmul.f32.gmra.mxu0 %v325
        %v395 = vpop.f32.mrf.mxu0
        %v396 = vadd.f32 0.0, %v395
        %397 = vmatmul.f32.gmra.mxu0 %v328
        %v398 = vpop.f32.mrf.mxu0
        %v399 = vadd.f32 0.0, %v398
        %400 = vmatmul.f32.gmra.mxu0 %v331
        %v401 = vpop.f32.mrf.mxu0
        %v402 = vadd.f32 0.0, %v401
        %403 = vmatmul.f32.gmra.mxu0 %v334
        %v404 = vpop.f32.mrf.mxu0
        %v405 = vadd.f32 0.0, %v404
        %406 = vmatmul.f32.gmra.mxu0 %v337
        %v407 = vpop.f32.mrf.mxu0
        %v408 = vadd.f32 0.0, %v407
        %409 = vmatmul.f32.gmra.mxu0 %v340
        %v410 = vpop.f32.mrf.mxu0
        %v411 = vadd.f32 0.0, %v410
        %412 = vmatmul.f32.gmra.mxu0 %v343
        %v413 = vpop.f32.mrf.mxu0
        %v414 = vadd.f32 0.0, %v413
        %415 = vmatmul.f32.gmra.mxu0 %v346
        %v416 = vpop.f32.mrf.mxu0
        %v417 = vadd.f32 0.0, %v416
        %418 = vmatmul.f32.gmra.mxu0 %v349
        %v419 = vpop.f32.mrf.mxu0
        %v420 = vadd.f32 0.0, %v419
        %421 = vmatmul.f32.gmra.mxu0 %v352
        %v422 = vpop.f32.mrf.mxu0
        %v423 = vadd.f32 0.0, %v422
        %424 = vmatmul.f32.gmra.mxu0 %v355
        %v425 = vpop.f32.mrf.mxu0
        %v426 = vadd.f32 0.0, %v425
        %427 = vmatmul.f32.gmra.mxu0 %v358
        %v428 = vpop.f32.mrf.mxu0
        %v429 = vadd.f32 0.0, %v428
        %430 = vmatmul.f32.gmra.mxu0 %v361
        %v431 = vpop.f32.mrf.mxu0
        %v432 = vadd.f32 0.0, %v431
        %433 = vmatmul.f32.gmra.mxu0 %v364
        %v434 = vpop.f32.mrf.mxu0
        %v435 = vadd.f32 0.0, %v434
        %436 = vmatmul.f32.gmra.mxu0 %v367
        %v437 = vpop.f32.mrf.mxu0
        %v438 = vadd.f32 0.0, %v437
        %439 = vmatmul.f32.gmra.mxu0 %v370
        %v440 = vpop.f32.mrf.mxu0
        %v441 = vadd.f32 0.0, %v440
        %442 = vdwg.mxu0
        %v443 = vld [vmem:[%s4] sm:$0x1]
        %v445 = vperm.slane %v443, 0
        %v447 = vld [vmem:[%s3] sm:$0xff]
        %v448 = vld [vmem:[%s3 + $0x8] sm:$0xff]
        %v449 = vld [vmem:[%s3 + $0x10] sm:$0xff]
        %v450 = vld [vmem:[%s3 + $0x18] sm:$0xff]
        %v451 = vld [vmem:[%s3 + $0x20] sm:$0xff]
        %v452 = vld [vmem:[%s3 + $0x28] sm:$0xff]
        %v453 = vld [vmem:[%s3 + $0x30] sm:$0xff]
        %v454 = vld [vmem:[%s3 + $0x38] sm:$0xff]
        %v455 = vld [vmem:[%s3 + $0x40] sm:$0xff]
        %v456 = vld [vmem:[%s3 + $0x48] sm:$0xff]
        %v457 = vld [vmem:[%s3 + $0x50] sm:$0xff]
        %v458 = vld [vmem:[%s3 + $0x58] sm:$0xff]
        %v459 = vld [vmem:[%s3 + $0x60] sm:$0xff]
        %v460 = vld [vmem:[%s3 + $0x68] sm:$0xff]
        %v461 = vld [vmem:[%s3 + $0x70] sm:$0xff]
        %v462 = vld [vmem:[%s3 + $0x78] sm:$0xff]
        %463 = vmatpush.msra.mxu0 %v462
        %464 = vmatpush.msra.mxu0 %v461
        %465 = vmatpush.msra.mxu0 %v460
        %466 = vmatpush.msra.mxu0 %v459
        %467 = vmatpush.msra.mxu0 %v458
        %468 = vmatpush.msra.mxu0 %v457
        %469 = vmatpush.msra.mxu0 %v456
        %470 = vmatpush.msra.mxu0 %v455
        %471 = vmatpush.msra.mxu0 %v454
        %472 = vmatpush.msra.mxu0 %v453
        %473 = vmatpush.msra.mxu0 %v452
        %474 = vmatpush.msra.mxu0 %v451
        %475 = vmatpush.msra.mxu0 %v450
        %476 = vmatpush.msra.mxu0 %v449
        %477 = vmatpush.msra.mxu0 %v448
        %478 = vmatpush.msra.mxu0 %v447
        %479 = vmatmul.f32.gmra.mxu0 %v390
        %v480 = vpop.f32.mrf.mxu0
        %v481 = vadd.f32 0.0, %v480
        %482 = vmatmul.f32.gmra.mxu0 %v393
        %v483 = vpop.f32.mrf.mxu0
        %v484 = vadd.f32 0.0, %v483
        %485 = vdwg.mxu0
        %v486 = vadd.f32 %v445, %v481
        %v487 = vadd.f32 %v445, %v484
        %s488 = scalar_lea.vmem %s3, 128
        %v489 = vld [vmem:[%s488] sm:$0xff]
        %v490 = vld [vmem:[%s488 + $0x8] sm:$0xff]
        %v491 = vld [vmem:[%s488 + $0x10] sm:$0xff]
        %v492 = vld [vmem:[%s488 + $0x18] sm:$0xff]
        %v493 = vld [vmem:[%s488 + $0x20] sm:$0xff]
        %v494 = vld [vmem:[%s488 + $0x28] sm:$0xff]
        %v495 = vld [vmem:[%s488 + $0x30] sm:$0xff]
        %v496 = vld [vmem:[%s488 + $0x38] sm:$0xff]
        %v497 = vld [vmem:[%s488 + $0x40] sm:$0xff]
        %v498 = vld [vmem:[%s488 + $0x48] sm:$0xff]
        %v499 = vld [vmem:[%s488 + $0x50] sm:$0xff]
        %v500 = vld [vmem:[%s488 + $0x58] sm:$0xff]
        %v501 = vld [vmem:[%s488 + $0x60] sm:$0xff]
        %v502 = vld [vmem:[%s488 + $0x68] sm:$0xff]
        %v503 = vld [vmem:[%s488 + $0x70] sm:$0xff]
        %v504 = vld [vmem:[%s488 + $0x78] sm:$0xff]
        %505 = vmatpush.msra.mxu0 %v504
        %506 = vmatpush.msra.mxu0 %v503
        %507 = vmatpush.msra.mxu0 %v502
        %508 = vmatpush.msra.mxu0 %v501
        %509 = vmatpush.msra.mxu0 %v500
        %510 = vmatpush.msra.mxu0 %v499
        %511 = vmatpush.msra.mxu0 %v498
        %512 = vmatpush.msra.mxu0 %v497
        %513 = vmatpush.msra.mxu0 %v496
        %514 = vmatpush.msra.mxu0 %v495
        %515 = vmatpush.msra.mxu0 %v494
        %516 = vmatpush.msra.mxu0 %v493
        %517 = vmatpush.msra.mxu0 %v492
        %518 = vmatpush.msra.mxu0 %v491
        %519 = vmatpush.msra.mxu0 %v490
        %520 = vmatpush.msra.mxu0 %v489
        %521 = vmatmul.f32.gmra.mxu0 %v396
        %v522 = vpop.f32.mrf.mxu0
        %v523 = vadd.f32 0.0, %v522
        %524 = vmatmul.f32.gmra.mxu0 %v399
        %v525 = vpop.f32.mrf.mxu0
        %v526 = vadd.f32 0.0, %v525
        %527 = vdwg.mxu0
        %v528 = vadd.f32 %v486, %v523
        %v529 = vadd.f32 %v487, %v526
        %s530 = scalar_lea.vmem %s3, 256
        %v531 = vld [vmem:[%s530] sm:$0xff]
        %v532 = vld [vmem:[%s530 + $0x8] sm:$0xff]
        %v533 = vld [vmem:[%s530 + $0x10] sm:$0xff]
        %v534 = vld [vmem:[%s530 + $0x18] sm:$0xff]
        %v535 = vld [vmem:[%s530 + $0x20] sm:$0xff]
        %v536 = vld [vmem:[%s530 + $0x28] sm:$0xff]
        %v537 = vld [vmem:[%s530 + $0x30] sm:$0xff]
        %v538 = vld [vmem:[%s530 + $0x38] sm:$0xff]
        %v539 = vld [vmem:[%s530 + $0x40] sm:$0xff]
        %v540 = vld [vmem:[%s530 + $0x48] sm:$0xff]
        %v541 = vld [vmem:[%s530 + $0x50] sm:$0xff]
        %v542 = vld [vmem:[%s530 + $0x58] sm:$0xff]
        %v543 = vld [vmem:[%s530 + $0x60] sm:$0xff]
        %v544 = vld [vmem:[%s530 + $0x68] sm:$0xff]
        %v545 = vld [vmem:[%s530 + $0x70] sm:$0xff]
        %v546 = vld [vmem:[%s530 + $0x78] sm:$0xff]
        %547 = vmatpush.msra.mxu0 %v546
        %548 = vmatpush.msra.mxu0 %v545
        %549 = vmatpush.msra.mxu0 %v544
        %550 = vmatpush.msra.mxu0 %v543
        %551 = vmatpush.msra.mxu0 %v542
        %552 = vmatpush.msra.mxu0 %v541
        %553 = vmatpush.msra.mxu0 %v540
        %554 = vmatpush.msra.mxu0 %v539
        %555 = vmatpush.msra.mxu0 %v538
        %556 = vmatpush.msra.mxu0 %v537
        %557 = vmatpush.msra.mxu0 %v536
        %558 = vmatpush.msra.mxu0 %v535
        %559 = vmatpush.msra.mxu0 %v534
        %560 = vmatpush.msra.mxu0 %v533
        %561 = vmatpush.msra.mxu0 %v532
        %562 = vmatpush.msra.mxu0 %v531
        %563 = vmatmul.f32.gmra.mxu0 %v402
        %v564 = vpop.f32.mrf.mxu0
        %v565 = vadd.f32 0.0, %v564
        %566 = vmatmul.f32.gmra.mxu0 %v405
        %v567 = vpop.f32.mrf.mxu0
        %v568 = vadd.f32 0.0, %v567
        %569 = vdwg.mxu0
        %v570 = vadd.f32 %v528, %v565
        %v571 = vadd.f32 %v529, %v568
        %s572 = scalar_lea.vmem %s3, 384
        %v573 = vld [vmem:[%s572] sm:$0xff]
        %v574 = vld [vmem:[%s572 + $0x8] sm:$0xff]
        %v575 = vld [vmem:[%s572 + $0x10] sm:$0xff]
        %v576 = vld [vmem:[%s572 + $0x18] sm:$0xff]
        %v577 = vld [vmem:[%s572 + $0x20] sm:$0xff]
        %v578 = vld [vmem:[%s572 + $0x28] sm:$0xff]
        %v579 = vld [vmem:[%s572 + $0x30] sm:$0xff]
        %v580 = vld [vmem:[%s572 + $0x38] sm:$0xff]
        %v581 = vld [vmem:[%s572 + $0x40] sm:$0xff]
        %v582 = vld [vmem:[%s572 + $0x48] sm:$0xff]
        %v583 = vld [vmem:[%s572 + $0x50] sm:$0xff]
        %v584 = vld [vmem:[%s572 + $0x58] sm:$0xff]
        %v585 = vld [vmem:[%s572 + $0x60] sm:$0xff]
        %v586 = vld [vmem:[%s572 + $0x68] sm:$0xff]
        %v587 = vld [vmem:[%s572 + $0x70] sm:$0xff]
        %v588 = vld [vmem:[%s572 + $0x78] sm:$0xff]
        %589 = vmatpush.msra.mxu0 %v588
        %590 = vmatpush.msra.mxu0 %v587
        %591 = vmatpush.msra.mxu0 %v586
        %592 = vmatpush.msra.mxu0 %v585
        %593 = vmatpush.msra.mxu0 %v584
        %594 = vmatpush.msra.mxu0 %v583
        %595 = vmatpush.msra.mxu0 %v582
        %596 = vmatpush.msra.mxu0 %v581
        %597 = vmatpush.msra.mxu0 %v580
        %598 = vmatpush.msra.mxu0 %v579
        %599 = vmatpush.msra.mxu0 %v578
        %600 = vmatpush.msra.mxu0 %v577
        %601 = vmatpush.msra.mxu0 %v576
        %602 = vmatpush.msra.mxu0 %v575
        %603 = vmatpush.msra.mxu0 %v574
        %604 = vmatpush.msra.mxu0 %v573
        %605 = vmatmul.f32.gmra.mxu0 %v408
        %v606 = vpop.f32.mrf.mxu0
        %v607 = vadd.f32 0.0, %v606
        %608 = vmatmul.f32.gmra.mxu0 %v411
        %v609 = vpop.f32.mrf.mxu0
        %v610 = vadd.f32 0.0, %v609
        %611 = vdwg.mxu0
        %v612 = vadd.f32 %v570, %v607
        %v613 = vadd.f32 %v571, %v610
        %s614 = scalar_lea.vmem %s3, 512
        %v615 = vld [vmem:[%s614] sm:$0xff]
        %v616 = vld [vmem:[%s614 + $0x8] sm:$0xff]
        %v617 = vld [vmem:[%s614 + $0x10] sm:$0xff]
        %v618 = vld [vmem:[%s614 + $0x18] sm:$0xff]
        %v619 = vld [vmem:[%s614 + $0x20] sm:$0xff]
        %v620 = vld [vmem:[%s614 + $0x28] sm:$0xff]
        %v621 = vld [vmem:[%s614 + $0x30] sm:$0xff]
        %v622 = vld [vmem:[%s614 + $0x38] sm:$0xff]
        %v623 = vld [vmem:[%s614 + $0x40] sm:$0xff]
        %v624 = vld [vmem:[%s614 + $0x48] sm:$0xff]
        %v625 = vld [vmem:[%s614 + $0x50] sm:$0xff]
        %v626 = vld [vmem:[%s614 + $0x58] sm:$0xff]
        %v627 = vld [vmem:[%s614 + $0x60] sm:$0xff]
        %v628 = vld [vmem:[%s614 + $0x68] sm:$0xff]
        %v629 = vld [vmem:[%s614 + $0x70] sm:$0xff]
        %v630 = vld [vmem:[%s614 + $0x78] sm:$0xff]
        %631 = vmatpush.msra.mxu0 %v630
        %632 = vmatpush.msra.mxu0 %v629
        %633 = vmatpush.msra.mxu0 %v628
        %634 = vmatpush.msra.mxu0 %v627
        %635 = vmatpush.msra.mxu0 %v626
        %636 = vmatpush.msra.mxu0 %v625
        %637 = vmatpush.msra.mxu0 %v624
        %638 = vmatpush.msra.mxu0 %v623
        %639 = vmatpush.msra.mxu0 %v622
        %640 = vmatpush.msra.mxu0 %v621
        %641 = vmatpush.msra.mxu0 %v620
        %642 = vmatpush.msra.mxu0 %v619
        %643 = vmatpush.msra.mxu0 %v618
        %644 = vmatpush.msra.mxu0 %v617
        %645 = vmatpush.msra.mxu0 %v616
        %646 = vmatpush.msra.mxu0 %v615
        %647 = vmatmul.f32.gmra.mxu0 %v414
        %v648 = vpop.f32.mrf.mxu0
        %v649 = vadd.f32 0.0, %v648
        %650 = vmatmul.f32.gmra.mxu0 %v417
        %v651 = vpop.f32.mrf.mxu0
        %v652 = vadd.f32 0.0, %v651
        %653 = vdwg.mxu0
        %v654 = vadd.f32 %v612, %v649
        %v655 = vadd.f32 %v613, %v652
        %s656 = scalar_lea.vmem %s3, 640
        %v657 = vld [vmem:[%s656] sm:$0xff]
        %v658 = vld [vmem:[%s656 + $0x8] sm:$0xff]
        %v659 = vld [vmem:[%s656 + $0x10] sm:$0xff]
        %v660 = vld [vmem:[%s656 + $0x18] sm:$0xff]
        %v661 = vld [vmem:[%s656 + $0x20] sm:$0xff]
        %v662 = vld [vmem:[%s656 + $0x28] sm:$0xff]
        %v663 = vld [vmem:[%s656 + $0x30] sm:$0xff]
        %v664 = vld [vmem:[%s656 + $0x38] sm:$0xff]
        %v665 = vld [vmem:[%s656 + $0x40] sm:$0xff]
        %v666 = vld [vmem:[%s656 + $0x48] sm:$0xff]
        %v667 = vld [vmem:[%s656 + $0x50] sm:$0xff]
        %v668 = vld [vmem:[%s656 + $0x58] sm:$0xff]
        %v669 = vld [vmem:[%s656 + $0x60] sm:$0xff]
        %v670 = vld [vmem:[%s656 + $0x68] sm:$0xff]
        %v671 = vld [vmem:[%s656 + $0x70] sm:$0xff]
        %v672 = vld [vmem:[%s656 + $0x78] sm:$0xff]
        %673 = vmatpush.msra.mxu0 %v672
        %674 = vmatpush.msra.mxu0 %v671
        %675 = vmatpush.msra.mxu0 %v670
        %676 = vmatpush.msra.mxu0 %v669
        %677 = vmatpush.msra.mxu0 %v668
        %678 = vmatpush.msra.mxu0 %v667
        %679 = vmatpush.msra.mxu0 %v666
        %680 = vmatpush.msra.mxu0 %v665
        %681 = vmatpush.msra.mxu0 %v664
        %682 = vmatpush.msra.mxu0 %v663
        %683 = vmatpush.msra.mxu0 %v662
        %684 = vmatpush.msra.mxu0 %v661
        %685 = vmatpush.msra.mxu0 %v660
        %686 = vmatpush.msra.mxu0 %v659
        %687 = vmatpush.msra.mxu0 %v658
        %688 = vmatpush.msra.mxu0 %v657
        %689 = vmatmul.f32.gmra.mxu0 %v420
        %v690 = vpop.f32.mrf.mxu0
        %v691 = vadd.f32 0.0, %v690
        %692 = vmatmul.f32.gmra.mxu0 %v423
        %v693 = vpop.f32.mrf.mxu0
        %v694 = vadd.f32 0.0, %v693
        %695 = vdwg.mxu0
        %v696 = vadd.f32 %v654, %v691
        %v697 = vadd.f32 %v655, %v694
        %s698 = scalar_lea.vmem %s3, 768
        %v699 = vld [vmem:[%s698] sm:$0xff]
        %v700 = vld [vmem:[%s698 + $0x8] sm:$0xff]
        %v701 = vld [vmem:[%s698 + $0x10] sm:$0xff]
        %v702 = vld [vmem:[%s698 + $0x18] sm:$0xff]
        %v703 = vld [vmem:[%s698 + $0x20] sm:$0xff]
        %v704 = vld [vmem:[%s698 + $0x28] sm:$0xff]
        %v705 = vld [vmem:[%s698 + $0x30] sm:$0xff]
        %v706 = vld [vmem:[%s698 + $0x38] sm:$0xff]
        %v707 = vld [vmem:[%s698 + $0x40] sm:$0xff]
        %v708 = vld [vmem:[%s698 + $0x48] sm:$0xff]
        %v709 = vld [vmem:[%s698 + $0x50] sm:$0xff]
        %v710 = vld [vmem:[%s698 + $0x58] sm:$0xff]
        %v711 = vld [vmem:[%s698 + $0x60] sm:$0xff]
        %v712 = vld [vmem:[%s698 + $0x68] sm:$0xff]
        %v713 = vld [vmem:[%s698 + $0x70] sm:$0xff]
        %v714 = vld [vmem:[%s698 + $0x78] sm:$0xff]
        %715 = vmatpush.msra.mxu0 %v714
        %716 = vmatpush.msra.mxu0 %v713
        %717 = vmatpush.msra.mxu0 %v712
        %718 = vmatpush.msra.mxu0 %v711
        %719 = vmatpush.msra.mxu0 %v710
        %720 = vmatpush.msra.mxu0 %v709
        %721 = vmatpush.msra.mxu0 %v708
        %722 = vmatpush.msra.mxu0 %v707
        %723 = vmatpush.msra.mxu0 %v706
        %724 = vmatpush.msra.mxu0 %v705
        %725 = vmatpush.msra.mxu0 %v704
        %726 = vmatpush.msra.mxu0 %v703
        %727 = vmatpush.msra.mxu0 %v702
        %728 = vmatpush.msra.mxu0 %v701
        %729 = vmatpush.msra.mxu0 %v700
        %730 = vmatpush.msra.mxu0 %v699
        %731 = vmatmul.f32.gmra.mxu0 %v426
        %v732 = vpop.f32.mrf.mxu0
        %v733 = vadd.f32 0.0, %v732
        %734 = vmatmul.f32.gmra.mxu0 %v429
        %v735 = vpop.f32.mrf.mxu0
        %v736 = vadd.f32 0.0, %v735
        %737 = vdwg.mxu0
        %v738 = vadd.f32 %v696, %v733
        %v739 = vadd.f32 %v697, %v736
        %s740 = scalar_lea.vmem %s3, 896
        %v741 = vld [vmem:[%s740] sm:$0xff]
        %v742 = vld [vmem:[%s740 + $0x8] sm:$0xff]
        %v743 = vld [vmem:[%s740 + $0x10] sm:$0xff]
        %v744 = vld [vmem:[%s740 + $0x18] sm:$0xff]
        %v745 = vld [vmem:[%s740 + $0x20] sm:$0xff]
        %v746 = vld [vmem:[%s740 + $0x28] sm:$0xff]
        %v747 = vld [vmem:[%s740 + $0x30] sm:$0xff]
        %v748 = vld [vmem:[%s740 + $0x38] sm:$0xff]
        %v749 = vld [vmem:[%s740 + $0x40] sm:$0xff]
        %v750 = vld [vmem:[%s740 + $0x48] sm:$0xff]
        %v751 = vld [vmem:[%s740 + $0x50] sm:$0xff]
        %v752 = vld [vmem:[%s740 + $0x58] sm:$0xff]
        %v753 = vld [vmem:[%s740 + $0x60] sm:$0xff]
        %v754 = vld [vmem:[%s740 + $0x68] sm:$0xff]
        %v755 = vld [vmem:[%s740 + $0x70] sm:$0xff]
        %v756 = vld [vmem:[%s740 + $0x78] sm:$0xff]
        %757 = vmatpush.msra.mxu0 %v756
        %758 = vmatpush.msra.mxu0 %v755
        %759 = vmatpush.msra.mxu0 %v754
        %760 = vmatpush.msra.mxu0 %v753
        %761 = vmatpush.msra.mxu0 %v752
        %762 = vmatpush.msra.mxu0 %v751
        %763 = vmatpush.msra.mxu0 %v750
        %764 = vmatpush.msra.mxu0 %v749
        %765 = vmatpush.msra.mxu0 %v748
        %766 = vmatpush.msra.mxu0 %v747
        %767 = vmatpush.msra.mxu0 %v746
        %768 = vmatpush.msra.mxu0 %v745
        %769 = vmatpush.msra.mxu0 %v744
        %770 = vmatpush.msra.mxu0 %v743
        %771 = vmatpush.msra.mxu0 %v742
        %772 = vmatpush.msra.mxu0 %v741
        %773 = vmatmul.f32.gmra.mxu0 %v432
        %v774 = vpop.f32.mrf.mxu0
        %v775 = vadd.f32 0.0, %v774
        %776 = vmatmul.f32.gmra.mxu0 %v435
        %v777 = vpop.f32.mrf.mxu0
        %v778 = vadd.f32 0.0, %v777
        %779 = vdwg.mxu0
        %v780 = vadd.f32 %v738, %v775
        %v781 = vadd.f32 %v739, %v778
        %s782 = scalar_lea.vmem %s3, 1024
        %v783 = vld [vmem:[%s782] sm:$0xff]
        %v784 = vld [vmem:[%s782 + $0x8] sm:$0xff]
        %v785 = vld [vmem:[%s782 + $0x10] sm:$0xff]
        %v786 = vld [vmem:[%s782 + $0x18] sm:$0xff]
        %v787 = vld [vmem:[%s782 + $0x20] sm:$0xff]
        %v788 = vld [vmem:[%s782 + $0x28] sm:$0xff]
        %v789 = vld [vmem:[%s782 + $0x30] sm:$0xff]
        %v790 = vld [vmem:[%s782 + $0x38] sm:$0xff]
        %v791 = vld [vmem:[%s782 + $0x40] sm:$0xff]
        %v792 = vld [vmem:[%s782 + $0x48] sm:$0xff]
        %v793 = vld [vmem:[%s782 + $0x50] sm:$0xff]
        %v794 = vld [vmem:[%s782 + $0x58] sm:$0xff]
        %v795 = vld [vmem:[%s782 + $0x60] sm:$0xff]
        %v796 = vld [vmem:[%s782 + $0x68] sm:$0xff]
        %v797 = vld [vmem:[%s782 + $0x70] sm:$0xff]
        %v798 = vld [vmem:[%s782 + $0x78] sm:$0xff]
        %799 = vmatpush.msra.mxu0 %v798
        %800 = vmatpush.msra.mxu0 %v797
        %801 = vmatpush.msra.mxu0 %v796
        %802 = vmatpush.msra.mxu0 %v795
        %803 = vmatpush.msra.mxu0 %v794
        %804 = vmatpush.msra.mxu0 %v793
        %805 = vmatpush.msra.mxu0 %v792
        %806 = vmatpush.msra.mxu0 %v791
        %807 = vmatpush.msra.mxu0 %v790
        %808 = vmatpush.msra.mxu0 %v789
        %809 = vmatpush.msra.mxu0 %v788
        %810 = vmatpush.msra.mxu0 %v787
        %811 = vmatpush.msra.mxu0 %v786
        %812 = vmatpush.msra.mxu0 %v785
        %813 = vmatpush.msra.mxu0 %v784
        %814 = vmatpush.msra.mxu0 %v783
        %815 = vmatmul.f32.gmra.mxu0 %v438
        %v816 = vpop.f32.mrf.mxu0
        %v817 = vadd.f32 0.0, %v816
        %818 = vmatmul.f32.gmra.mxu0 %v441
        %v819 = vpop.f32.mrf.mxu0
        %v820 = vadd.f32 0.0, %v819
        %821 = vdwg.mxu0
        %v822 = vadd.f32 %v780, %v817
        %v823 = vadd.f32 %v781, %v820
        %v824 = vmax.f32 %v822, 0.0
        %v825 = vmax.f32 %v823, 0.0
        %826 = vst [vmem:[%s218] sm:$0xff] %v824
        %827 = vst [vmem:[%s218 + $0x8] sm:$0xff] %v825
        %s828 = sand.u32 %s137, 1
        %s829 = scalar_lea.sflag [#allocation3], %s828
        %s830 = sand.u32 %s137, 1
        %s831 = smul.addr %s830, 16
        %s832 = scalar_lea.vmem [#allocation2], %s831
        // Predicated region
        $region41: #{conv_ae_forward.1} parent=39 // pred_check
          %p833 = pneg %p147
        $region42: #{conv_ae_forward.1} parent=39 // pred_check_branch
          %835 = sbr.rel (%p833) target = $region44
        $region43: #{conv_ae_forward.1} parent=39 // pred_region
          %s836 = smul.u32 2, %s19
          %838 = vsyncadd %s829, 0
          %s839 = smul.addr %s836, 8
          %s840 = scalar_lea.hbm %s5, %s839
          %s841 = sshll.u32 %s832, 4
          %s842 = int_to_ptr.vmem [resolvable:$true] %s841
          %s843 = sshll.u32 %s840, 4
          %s844 = int_to_ptr.hbm [resolvable:$true] %s843
          %849 = dma.vmem_to_hbm [thread:$0]  %s842, 256, %s844, %s829, 128, 128, 8
        $region44: #{conv_ae_forward.1} parent=39 // pred_fallthru
          _
      $region40: #{conv_ae_forward.1} parent=5 // pred_fallthru
        _
      %p850 = scmp.le.s32.totalorder 2, %s14
      // Predicated region
      $region45: #{conv_ae_forward.1} parent=5 // pred_check
        %p851 = pneg %p850
      $region46: #{conv_ae_forward.1} parent=5 // pred_check_branch
        %853 = sbr.rel (%p851) target = $region48
      $region47: #{conv_ae_forward.1} parent=5 // pred_region
        %s854 = ssub.s32 %s14, 2
        // Predicated region
        $region49: #{conv_ae_forward.1} parent=47 // pred_check
          %p855 = pneg %p153
        $region50: #{conv_ae_forward.1} parent=47 // pred_check_branch
          %857 = sbr.rel (%p855) target = $region52
        $region51: #{conv_ae_forward.1} parent=47 // pred_region
          %s858 = sand.u32 %s138, 1
          %s859 = scalar_lea.sflag [#allocation3], %s858
          %s860 = sand.u32 %s138, 1
          %s861 = smul.addr %s860, 16
          %s862 = scalar_lea.vmem [#allocation2], %s861
          %864 = dma.done %s859, 256
        $region52: #{conv_ae_forward.1} parent=47 // pred_fallthru
          _
      $region48: #{conv_ae_forward.1} parent=5 // pred_fallthru
        _
    $region6: #{conv_ae_forward.1} parent=1 // loop_footer
      %s18 = sadd.s32 1, %s14
    $region7: #{conv_ae_forward.1} parent=1 // loop_footer_branch
      %13 = sbr.rel target = $region3
    $region8: #{conv_ae_forward.1} parent=1 // loop_exit
      _
    %865 = vsyncpa [#allocation3], 1
    %s866 = scalar_lea.sflag [#allocation3], 1
    %867 = vsyncpa %s866, 1

</llo_original>
